<compile_context>
chip_gen: v7x
topology: tpu7x:2x2x1
jax: 0.10.0
libtpu: 0.0.40
codegen_flags: <defaults>
</compile_context>

<pallas_src>
import functools

import jax
import jax.numpy as jnp
from jax.experimental import pallas as pl
from jax.experimental.pallas import tpu as pltpu


def _cls_loss_kernel(x_ref, t_ref, w_ref, o_ref, acc_ref, *,
                     n_rows, tiles_per_split):
    # x_ref : (TILE_N, C) logits                (VMEM, streamed)
    # t_ref : (TILE_N, 1) int32 class indices   (VMEM, streamed; -1 = pad row)
    # w_ref : (1, C) float32 class weights      (VMEM, resident across steps)
    # o_ref : (1, 2) float32 [num, den] partial (SMEM, one block per split)
    # acc_ref: (2,) float32 [num, den]          (SMEM scratch, per-core)
    s = pl.program_id(0)            # parallel split (one per TensorCore on v7x)
    i = pl.program_id(1)            # reduction step within the split

    @pl.when(i == 0)
    def _():
        acc_ref[0] = jnp.float32(0.0)
        acc_ref[1] = jnp.float32(0.0)

    x = x_ref[...].astype(jnp.float32)          # (TILE_N, C)
    t = t_ref[...]                              # (TILE_N, 1)
    w = w_ref[...].astype(jnp.float32)          # (1, C)
    tile_n = x.shape[0]

    # batch-tail mask: rows past the true N (partial / clamped last tile) -> 0
    row0 = (s * tiles_per_split + i) * tile_n
    row_iota = jax.lax.broadcasted_iota(jnp.int32, (tile_n, 1), 0)
    valid = (row0 + row_iota) < n_rows                                   # (TILE_N, 1)

    # numerically-stable logsumexp along classes
    m = jnp.max(x, axis=-1, keepdims=True)                               # (TILE_N, 1)
    lse = jnp.log(jnp.sum(jnp.exp(x - m), axis=-1, keepdims=True)) + m   # (TILE_N, 1)

    # bool mask via iota compare (no f32 one-hot materialization)
    col_iota = jax.lax.broadcasted_iota(jnp.int32, x.shape, 1)           # (TILE_N, C)
    mask = col_iota == t                                                 # bool

    picked = jnp.sum(jnp.where(mask, x, 0.0), axis=-1, keepdims=True)    # x[i, t_i]
    w_i = jnp.sum(jnp.where(mask, w, 0.0), axis=-1, keepdims=True)       # w[t_i]

    num = jnp.where(valid, w_i * (lse - picked), 0.0)   # NaN/inf in masked rows dropped
    den = jnp.where(valid, w_i, 0.0)

    acc_ref[0] += jnp.sum(num)
    acc_ref[1] += jnp.sum(den)

    @pl.when(i == pl.num_programs(1) - 1)
    def _():
        o_ref[0, 0] = acc_ref[0]
        o_ref[0, 1] = acc_ref[1]


def _round_up(v, m):
    return ((v + m - 1) // m) * m


def cls_loss(logits, target, weight, *, tile_bytes=4 * 1024 * 1024, n_splits=2):
    """logits: (N, C) float; target: (N,) int; weight: (C,) float -> scalar f32."""
    N, C = logits.shape
    itemsize = jnp.dtype(logits.dtype).itemsize
    sublane = {4: 8, 2: 16, 1: 32}.get(itemsize, 8)   # dtype-aware sublane packing

    # --- batch tile: ~tile_bytes of logits (input dtype) per step, with the
    #     per-tile f32 temporaries capped at ~8 MiB so double-buffering fits v7x ---
    rows = min(tile_bytes // max(1, C * itemsize),
               (8 * 1024 * 1024) // max(1, C * 4),
               1024)
    tile_n = max(sublane, (rows // sublane) * sublane)
    tile_n = min(tile_n, _round_up(N, sublane))       # don't over-allocate tiny batches

    num_blocks = pl.cdiv(N, tile_n)                   # true logits blocks (no padding!)
    n_splits = max(1, min(n_splits, num_blocks))      # v7x: 2 TCs; harmless elsewhere
    tiles_per_split = pl.cdiv(num_blocks, n_splits)
    total_tiles = n_splits * tiles_per_split

    # --- only the tiny targets array is padded (logits stay untouched in HBM) ---
    t2 = target.astype(jnp.int32).reshape(N, 1)
    n_t = total_tiles * tile_n
    if n_t != N:
        t2 = jnp.pad(t2, ((0, n_t - N), (0, 0)), constant_values=-1)
    w2 = weight.astype(jnp.float32).reshape(1, C)

    last_block = num_blocks - 1

    def x_map(s, i):
        # clamp so an over-provisioned split never indexes past the array;
        # the in-kernel row mask zeroes any duplicated rows.
        return (jnp.minimum(s * tiles_per_split + i, last_block), 0)

    def t_map(s, i):
        return (s * tiles_per_split + i, 0)

    # --- VMEM limit per chip generation (v5e/v6e: 128 MiB phys -> 64; v7x: 64 -> 48) ---
    try:
        vmem_cap = pltpu.get_tpu_info().vmem_capacity_bytes
    except Exception:
        vmem_cap = 64 * 1024 * 1024
    vmem_limit = min(64 * 1024 * 1024, int(vmem_cap * 3 // 4))

    kern = functools.partial(_cls_loss_kernel, n_rows=N,
                             tiles_per_split=tiles_per_split)

    partials = pl.pallas_call(
        kern,
        out_shape=jax.ShapeDtypeStruct((n_splits, 2), jnp.float32),
        grid_spec=pltpu.PrefetchScalarGridSpec(
            num_scalar_prefetch=0,
            grid=(n_splits, tiles_per_split),
            in_specs=[
                pl.BlockSpec((tile_n, C), x_map),              # streamed logits (true C)
                pl.BlockSpec((tile_n, 1), t_map),              # streamed targets
                pl.BlockSpec((1, C), lambda s, i: (0, 0)),     # resident weights
            ],
            out_specs=pl.BlockSpec((1, 2), lambda s, i: (s, 0),
                                   memory_space=pltpu.MemorySpace.SMEM),
            scratch_shapes=[pltpu.SMEM((2,), jnp.float32)],
        ),
        compiler_params=pltpu.CompilerParams(
            dimension_semantics=("parallel", "arbitrary"),
            vmem_limit_bytes=vmem_limit,
        ),
        cost_estimate=pl.CostEstimate(
            flops=int(5 * N * C),
            transcendentals=int(N * C),
            bytes_accessed=int(N * C * itemsize + N * 4 + C * 4 + n_splits * 8),
        ),
    )(logits, t2, w2)

    # final reduction over per-core partials in the wrapper (scalar work)
    return jnp.sum(partials[:, 0]) / jnp.sum(partials[:, 1])


def cls_loss_ref(logits, target, weight):
    """Pure-JAX reference for validation (same math as F.cross_entropy)."""
    x = logits.astype(jnp.float32)
    lse = jax.nn.logsumexp(x, axis=-1)
    picked = jnp.take_along_axis(x, target[:, None].astype(jnp.int32), axis=-1)[:, 0]
    w_i = weight[target]
    return jnp.sum(w_i * (lse - picked)) / jnp.sum(w_i)


if __name__ == "__main__":
    N, C = 8, 32  # batch of 8 samples, 32 classes

    key = jax.random.PRNGKey(0)
    kx, kt = jax.random.split(key)
    logits = jax.random.normal(kx, (N, C), dtype=jnp.float32)
    target = jax.random.randint(kt, (N,), 0, C, dtype=jnp.int32)
    # deterministic per-class weights (stand-in for the `weight` ctor arg)
    weight = jnp.linspace(0.5, 1.5, C, dtype=jnp.float32)

    loss = cls_loss(logits, target, weight)
    jax.block_until_ready(loss)

    ref = cls_loss_ref(logits, target, weight)
    assert jnp.allclose(loss, ref, atol=1e-5, rtol=1e-5), (loss, ref)

    print("KERNEL_OK")
</pallas_src>

<mosaic_0001>
module attributes {stable_mosaic.version = 11 : i64} {
  func.func @_cls_loss_kernel(%arg0: i32, %arg1: i32, %arg2: memref<8x32xf32, #tpu.memory_space<vmem>>, %arg3: memref<8x1xi32, #tpu.memory_space<vmem>>, %arg4: memref<1x32xf32, #tpu.memory_space<vmem>>, %arg5: memref<1x2xf32, #tpu.memory_space<smem>>, %arg6: memref<2xf32, #tpu.memory_space<smem>>) attributes {dimension_semantics = [#tpu.dimension_semantics<parallel>, #tpu.dimension_semantics<arbitrary>], iteration_bounds = array<i64: 1, 1>, scalar_prefetch = 0 : i64, scratch_operands = 1 : i64, tpu.core_type = #tpu.core_type<tc>, window_params = [{transform_indices = @transform_0, window_bounds = array<i64: 8, 32>}, {transform_indices = @transform_1, window_bounds = array<i64: 8, 1>}, {pipeline_mode = #tpu.pipeline_mode<synchronous>, transform_indices = @transform_2, window_bounds = array<i64: 1, 32>}, {transform_indices = @transform_3, window_bounds = array<i64: 1, 2>}]} {
    %c0_i32 = arith.constant 0 : i32
    %0 = arith.cmpi eq, %arg1, %c0_i32 : i32
    %1 = arith.extui %0 : i1 to i32
    %c0_i32_0 = arith.constant 0 : i32
    %2 = arith.cmpi ne, %1, %c0_i32_0 : i32
    scf.if %2 {
      %cst_21 = arith.constant 0.000000e+00 : f32
      %c0_22 = arith.constant 0 : index
      %59 = memref.load %arg6[%c0_22] : memref<2xf32, #tpu.memory_space<smem>>
      memref.store %cst_21, %arg6[%c0_22] : memref<2xf32, #tpu.memory_space<smem>>
      %cst_23 = arith.constant 0.000000e+00 : f32
      %c1_24 = arith.constant 1 : index
      %60 = memref.load %arg6[%c1_24] : memref<2xf32, #tpu.memory_space<smem>>
      memref.store %cst_23, %arg6[%c1_24] : memref<2xf32, #tpu.memory_space<smem>>
    } else {
    }
    %c0 = arith.constant 0 : index
    %c0_1 = arith.constant 0 : index
    %3 = vector.load %arg2[%c0, %c0_1] : memref<8x32xf32, #tpu.memory_space<vmem>>, vector<8x32xf32>
    %c0_2 = arith.constant 0 : index
    %c0_3 = arith.constant 0 : index
    %4 = vector.load %arg3[%c0_2, %c0_3] : memref<8x1xi32, #tpu.memory_space<vmem>>, vector<8x1xi32>
    %c0_4 = arith.constant 0 : index
    %c0_5 = arith.constant 0 : index
    %5 = vector.load %arg4[%c0_4, %c0_5] : memref<1x32xf32, #tpu.memory_space<vmem>>, vector<1x32xf32>
    %c1_i32 = arith.constant 1 : i32
    %6 = arith.muli %arg0, %c1_i32 : i32
    %7 = arith.addi %6, %arg1 : i32
    %c8_i32 = arith.constant 8 : i32
    %8 = arith.muli %7, %c8_i32 : i32
    %9 = tpu.iota {dimensions = array<i32: 0>} : vector<8x1xi32>
    %10 = vector.broadcast %8 : i32 to vector<8x1xi32>
    %11 = arith.addi %10, %9 : vector<8x1xi32>
    %c8_i32_6 = arith.constant 8 : i32
    %12 = vector.broadcast %c8_i32_6 : i32 to vector<8x1xi32>
    %13 = arith.cmpi slt, %11, %12 : vector<8x1xi32>
    %cst = arith.constant dense<0xFF800000> : vector<8xf32>
    %14 = vector.multi_reduction <maximumf>, %3, %cst [1] : vector<8x32xf32> to vector<8xf32>
    %15 = vector.shape_cast %14 : vector<8xf32> to vector<8x1xf32>
    %16 = vector.broadcast %15 : vector<8x1xf32> to vector<8x32xf32>
    %17 = arith.subf %3, %16 : vector<8x32xf32>
    %18 = math.exp %17 : vector<8x32xf32>
    %cst_7 = arith.constant dense<0.000000e+00> : vector<8xf32>
    %19 = vector.multi_reduction <add>, %18, %cst_7 [1] : vector<8x32xf32> to vector<8xf32>
    %20 = vector.shape_cast %19 : vector<8xf32> to vector<8x1xf32>
    %21 = math.log %20 : vector<8x1xf32>
    %22 = arith.addf %21, %15 : vector<8x1xf32>
    %23 = tpu.iota {dimensions = array<i32: 1>} : vector<8x32xi32>
    %24 = vector.broadcast %4 : vector<8x1xi32> to vector<8x32xi32>
    %25 = arith.cmpi eq, %23, %24 : vector<8x32xi32>
    %cst_8 = arith.constant 0.000000e+00 : f32
    %26 = vector.broadcast %cst_8 : f32 to vector<8x32xf32>
    %27 = arith.select %25, %3, %26 : vector<8x32xi1>, vector<8x32xf32>
    %cst_9 = arith.constant dense<0.000000e+00> : vector<8xf32>
    %28 = vector.multi_reduction <add>, %27, %cst_9 [1] : vector<8x32xf32> to vector<8xf32>
    %29 = vector.shape_cast %28 : vector<8xf32> to vector<8x1xf32>
    %cst_10 = arith.constant 0.000000e+00 : f32
    %30 = vector.shape_cast %5 : vector<1x32xf32> to vector<1x32xf32>
    %31 = vector.broadcast %30 : vector<1x32xf32> to vector<8x32xf32>
    %32 = vector.broadcast %cst_10 : f32 to vector<8x32xf32>
    %33 = arith.select %25, %31, %32 : vector<8x32xi1>, vector<8x32xf32>
    %cst_11 = arith.constant dense<0.000000e+00> : vector<8xf32>
    %34 = vector.multi_reduction <add>, %33, %cst_11 [1] : vector<8x32xf32> to vector<8xf32>
    %35 = vector.shape_cast %34 : vector<8xf32> to vector<8x1xf32>
    %36 = arith.subf %22, %29 : vector<8x1xf32>
    %37 = arith.mulf %35, %36 : vector<8x1xf32>
    %cst_12 = arith.constant 0.000000e+00 : f32
    %38 = vector.broadcast %cst_12 : f32 to vector<8x1xf32>
    %39 = arith.select %13, %37, %38 : vector<8x1xi1>, vector<8x1xf32>
    %cst_13 = arith.constant 0.000000e+00 : f32
    %40 = vector.broadcast %cst_13 : f32 to vector<8x1xf32>
    %41 = arith.select %13, %35, %40 : vector<8x1xi1>, vector<8x1xf32>
    %c0_14 = arith.constant 0 : index
    %42 = memref.load %arg6[%c0_14] : memref<2xf32, #tpu.memory_space<smem>>
    %43 = vector.shape_cast %39 : vector<8x1xf32> to vector<1x8x1xf32>
    %cst_15 = arith.constant dense<0.000000e+00> : vector<1xf32>
    %44 = vector.multi_reduction <add>, %43, %cst_15 [1, 2] : vector<1x8x1xf32> to vector<1xf32>
    %45 = vector.shape_cast %44 : vector<1xf32> to vector<1x1x1xf32>
    %46 = vector.extract %45[0, 0, 0] : f32 from vector<1x1x1xf32>
    %47 = arith.addf %42, %46 : f32
    %c0_16 = arith.constant 0 : index
    %48 = memref.load %arg6[%c0_16] : memref<2xf32, #tpu.memory_space<smem>>
    memref.store %47, %arg6[%c0_16] : memref<2xf32, #tpu.memory_space<smem>>
    %c1 = arith.constant 1 : index
    %49 = memref.load %arg6[%c1] : memref<2xf32, #tpu.memory_space<smem>>
    %50 = vector.shape_cast %41 : vector<8x1xf32> to vector<1x8x1xf32>
    %cst_17 = arith.constant dense<0.000000e+00> : vector<1xf32>
    %51 = vector.multi_reduction <add>, %50, %cst_17 [1, 2] : vector<1x8x1xf32> to vector<1xf32>
    %52 = vector.shape_cast %51 : vector<1xf32> to vector<1x1x1xf32>
    %53 = vector.extract %52[0, 0, 0] : f32 from vector<1x1x1xf32>
    %54 = arith.addf %49, %53 : f32
    %c1_18 = arith.constant 1 : index
    %55 = memref.load %arg6[%c1_18] : memref<2xf32, #tpu.memory_space<smem>>
    memref.store %54, %arg6[%c1_18] : memref<2xf32, #tpu.memory_space<smem>>
    %c0_i32_19 = arith.constant 0 : i32
    %56 = arith.cmpi eq, %arg1, %c0_i32_19 : i32
    %57 = arith.extui %56 : i1 to i32
    %c0_i32_20 = arith.constant 0 : i32
    %58 = arith.cmpi ne, %57, %c0_i32_20 : i32
    scf.if %58 {
      %c0_21 = arith.constant 0 : index
      %59 = memref.load %arg6[%c0_21] : memref<2xf32, #tpu.memory_space<smem>>
      %c0_22 = arith.constant 0 : index
      %c0_23 = arith.constant 0 : index
      %60 = memref.load %arg5[%c0_22, %c0_23] : memref<1x2xf32, #tpu.memory_space<smem>>
      memref.store %59, %arg5[%c0_22, %c0_23] : memref<1x2xf32, #tpu.memory_space<smem>>
      %c1_24 = arith.constant 1 : index
      %61 = memref.load %arg6[%c1_24] : memref<2xf32, #tpu.memory_space<smem>>
      %c0_25 = arith.constant 0 : index
      %c1_26 = arith.constant 1 : index
      %62 = memref.load %arg5[%c0_25, %c1_26] : memref<1x2xf32, #tpu.memory_space<smem>>
      memref.store %61, %arg5[%c0_25, %c1_26] : memref<1x2xf32, #tpu.memory_space<smem>>
    } else {
    }
    return
  }
  func.func @transform_0(%arg0: i32, %arg1: i32) -> (i32, i32) {
    %c1_i32 = arith.constant 1 : i32
    %0 = arith.muli %arg0, %c1_i32 : i32
    %1 = arith.addi %0, %arg1 : i32
    %c0_i32 = arith.constant 0 : i32
    %2 = arith.minsi %1, %c0_i32 : i32
    %c0_i32_0 = arith.constant 0 : i32
    %c0_i32_1 = arith.constant 0 : i32
    return %2, %c0_i32_0 : i32, i32
  }
  func.func @transform_1(%arg0: i32, %arg1: i32) -> (i32, i32) {
    %c1_i32 = arith.constant 1 : i32
    %0 = arith.muli %arg0, %c1_i32 : i32
    %1 = arith.addi %0, %arg1 : i32
    %c0_i32 = arith.constant 0 : i32
    %c0_i32_0 = arith.constant 0 : i32
    return %1, %c0_i32 : i32, i32
  }
  func.func @transform_2(%arg0: i32, %arg1: i32) -> (i32, i32) {
    %c0_i32 = arith.constant 0 : i32
    %c0_i32_0 = arith.constant 0 : i32
    %c0_i32_1 = arith.constant 0 : i32
    return %c0_i32, %c0_i32_0 : i32, i32
  }
  func.func @transform_3(%arg0: i32, %arg1: i32) -> (i32, i32) {
    %c0_i32 = arith.constant 0 : i32
    %c0_i32_0 = arith.constant 0 : i32
    return %arg0, %c0_i32 : i32, i32
  }
}

</mosaic_0001>

<llo_original>
// kernel: tpu_custom_call.1
$region0: #{tpu_custom_call.1}
  #allocation0 [shape = 'u32[]', space=smem, size = 0x4, offset = 0x4, fixed_abs, tag = 'smem constant byte address 0x4 - core index']
  #allocation1 [shape = 'u32[144,128]{1,0:T(1,128)}', space=vmem, size = 0x12000, scoped, tag = 'internal scratch']
  #allocation2 [shape = 'f32[2]{0:T(128)}', space=smem, size = 0x200, scoped, tag = 'scratch operand']
  %s0 = inlined_call_operand.vmem [shape: f32[8,32], index: 0, kind: input, shape index: {}]
  %s1 = inlined_call_operand.vmem [shape: s32[8,1], index: 1, kind: input, shape index: {}]
  %s2 = inlined_call_operand.vmem [shape: f32[1,32], index: 2, kind: input, shape index: {}]
  %s3 = inlined_call_operand.hbm [shape: f32[1,2], index: 3, kind: output, shape index: {}]
  %s4 = sld [smem:[#allocation0]]
  $region30: #{tpu_custom_call.1} parent=0
    _
  %s6 = ssub.s32 1, %s4
  %s7 = scalar_select 0, %s6, %s4
  $region1: #{tpu_custom_call.1} parent=0
    #allocation3 [shape = 'u8[512]{0}', space=smem, size = 0x200, scoped, tag = 'output window, operand 0, single buffered']
    #allocation4 [shape = 's32[1]{0}', space=sflag, size = 0x4, scoped, tag = 'scoped memory for tpu_custom_call.1']
    %8 = vsyncpa [#allocation4], 0
    // Predicated region
    $region2: #{tpu_custom_call.1} parent=1 // pred_check
      _
    $region3: #{tpu_custom_call.1} parent=1 // pred_check_branch
      %10 = sbr.rel (0) target = $region5
    $region4: #{tpu_custom_call.1} parent=1 // pred_region
      %s11 = sadd.s32 0, 0
      %p12 = scmp.lt.s32.totalorder %s11, 0
      %s13 = scalar_select %p12, %s11, 0
      %p14 = scmp.lt.s32.totalorder %s13, 0
      %s15 = scalar_select %p14, %s13, 0
      %s16 = smul.addr %s15, 8
      %s17 = scalar_lea.vmem %s0, %s16
      %s18 = sadd.s32 0, 0
      %p19 = scmp.lt.s32.totalorder %s18, 0
      %s20 = scalar_select %p19, %s18, 0
    $region5: #{tpu_custom_call.1} parent=1 // pred_fallthru
      _
    // Predicated region
    $region6: #{tpu_custom_call.1} parent=1 // pred_check
      _
    $region7: #{tpu_custom_call.1} parent=1 // pred_check_branch
      %22 = sbr.rel (0) target = $region9
    $region8: #{tpu_custom_call.1} parent=1 // pred_region
      %s23 = sadd.s32 0, 0
      %p24 = scmp.lt.s32.totalorder %s23, 0
      %s25 = scalar_select %p24, %s23, 0
      %s26 = smul.addr %s25, 8
      %s27 = scalar_lea.vmem %s1, %s26
      %s28 = sadd.s32 0, 0
    $region9: #{tpu_custom_call.1} parent=1 // pred_fallthru
      _
    // Predicated region
    $region10: #{tpu_custom_call.1} parent=1 // pred_check
      _
    $region11: #{tpu_custom_call.1} parent=1 // pred_check_branch
      %30 = sbr.rel (0) target = $region13
    $region12: #{tpu_custom_call.1} parent=1 // pred_region
      _
    $region13: #{tpu_custom_call.1} parent=1 // pred_fallthru
      _
    %s31 = sadd.s32 0, 0
    %p32 = scmp.lt.s32.totalorder %s31, 0
    %s33 = scalar_select %p32, %s31, 0
    %p34 = scmp.lt.s32.totalorder %s33, 0
    %s35 = scalar_select %p34, %s33, 0
    %s36 = smul.addr %s35, 8
    %s37 = scalar_lea.vmem %s0, %s36
    %s38 = sadd.s32 0, 0
    %p39 = scmp.lt.s32.totalorder %s38, 0
    %s40 = scalar_select %p39, %s38, 0
    %s41 = smul.addr %s40, 8
    %s42 = scalar_lea.vmem %s1, %s41
    %s43 = sadd.s32 0, 0
    %p44 = scmp.lt.s32.totalorder %s43, 0
    %s45 = scalar_select %p44, %s43, 0
    %p46 = scmp.lt.s32.totalorder %s45, 0
    %s47 = scalar_select %p46, %s45, 0
    %s48 = smul.addr %s47, 8
    %s49 = scalar_lea.vmem %s0, %s48
    %s50 = sadd.s32 0, 0
    %p51 = scmp.lt.s32.totalorder %s50, 0
    %s52 = scalar_select %p51, %s50, 0
    %s53 = sadd.s32 0, 0
    %p54 = scmp.lt.s32.totalorder %s53, 0
    %s55 = scalar_select %p54, %s53, 0
    %s56 = smul.addr %s55, 8
    %s57 = scalar_lea.vmem %s1, %s56
    %s58 = sadd.s32 0, 0
    %p59 = scmp.eq.s32.totalorder 0, 0
    // Predicated region
    $region14: #{tpu_custom_call.1} parent=1 // pred_check
      %p60 = pneg %p59
    $region15: #{tpu_custom_call.1} parent=1 // pred_check_branch
      %62 = sbr.rel (%p60) target = $region17
    $region16: #{tpu_custom_call.1} parent=1 // pred_region
      %s63 = scalar_lea.smem [#allocation2], 0
      %64 = sst [smem:[%s63]] 0.0
      %s65 = scalar_lea.smem [#allocation2], 1
      %66 = sst [smem:[%s65]] 0.0
    $region17: #{tpu_custom_call.1} parent=1 // pred_fallthru
      _
    %v67 = vld [vmem:[%s49] sm:$0xff]
    %v68 = vld [vmem:[%s57] sm:$0xff]
    %v69 = vld [vmem:[%s2] sm:$0x1]
    %s70 = sadd.s32 0, 0
    %s71 = smul.u32 %s70, 8
    %v72 = vlaneseq
    %v73 = vshrl.u32 %v72, 7
    %v74 = vstv %s71
    %v75 = vadd.s32 %v74, %v73
    %vm76 = vcmp.lt.s32.totalorder %v75, 8
    %vm77 = vcmask 261120
    %v78 = vsel %vm77, %v67, -inf
    %79 = vmax.xlane.f32.xlu0 %v78
    %v80 = vpop.xlane.xlu0 %79
    %v81 = vsub.f32 %v67, %v80
    %v82 = vmul.f32 %v81, 1.442695
    %v83 = vpow.pop %v82
    %v84 = vsel %vm77, %v83, 0.0
    %85 = vadd.xlane.f32.xlu0 %v84
    %v86 = vpop.xlane.xlu0 %85
    %v87 = vlog2.pop %v86
    %v88 = vmul.f32 %v87, 0.6931472
    %v89 = vadd.f32 %v88, %v80
    %v90 = vlaneseq
    %v91 = vand.u32 %v90, 127
    %92 = vset.pattern.permute.xlu0 0
    %93 = vperm.xlu0 %92, %v68
    %v94 = vpop.permute.xlu0 %93
    %vm95 = vcmp.eq.s32.totalorder %v91, %v94
    %v96 = vsel %vm95, %v67, 0.0
    %v97 = vsel %vm77, %v96, 0.0
    %98 = vadd.xlane.f32.xlu0 %v97
    %v99 = vpop.xlane.xlu0 %98
    %v101 = vlaneseq
    %v102 = vshrl.u32 %v101, 7
    %v103 = vsub.s32 0, %v102
    %v104 = vrot.slane %v69, %v103
    %v106 = vsel %vm95, %v104, 0.0
    %v107 = vsel %vm77, %v106, 0.0
    %108 = vadd.xlane.f32.xlu0 %v107
    %v109 = vpop.xlane.xlu0 %108
    %v110 = vsub.f32 %v89, %v99
    %v111 = vmul.f32 %v109, %v110
    %v112 = vsel %vm76, %v111, 0.0
    %v113 = vsel %vm76, %v109, 0.0
    %s114 = sld [smem:[#allocation2]]
    %vm115 = vcmask 7168
    %v116 = vsel %vm115, %v112, 0.0
    %117 = vadd.xlane.f32.xlu0 %v116
    %v118 = vpop.xlane.xlu0 %117
    %v119 = vrot.slane %v118, 4
    %v120 = vadd.f32 %v118, %v119
    %v121 = vrot.slane %v120, 2
    %v122 = vadd.f32 %v120, %v121
    %v123 = vrot.slane %v122, 1
    %v124 = vadd.f32 %v122, %v123
    %s125 = vtos %v124
    %s126 = sadd.f32 %s114, %s125
    %s127 = scalar_lea.smem [#allocation2], 0
    %128 = sst [smem:[%s127]] %s126
    %s129 = sld [smem:[#allocation2 + $0x1]]
    %v130 = vsel %vm115, %v113, 0.0
    %131 = vadd.xlane.f32.xlu0 %v130
    %v132 = vpop.xlane.xlu0 %131
    %v133 = vrot.slane %v132, 4
    %v134 = vadd.f32 %v132, %v133
    %v135 = vrot.slane %v134, 2
    %v136 = vadd.f32 %v134, %v135
    %v137 = vrot.slane %v136, 1
    %v138 = vadd.f32 %v136, %v137
    %s139 = vtos %v138
    %s140 = sadd.f32 %s129, %s139
    %s141 = scalar_lea.smem [#allocation2], 1
    %142 = sst [smem:[%s141]] %s140
    // Predicated region
    $region18: #{tpu_custom_call.1} parent=1 // pred_check
      %p143 = pneg %p59
    $region19: #{tpu_custom_call.1} parent=1 // pred_check_branch
      %145 = sbr.rel (%p143) target = $region21
    $region20: #{tpu_custom_call.1} parent=1 // pred_region
      %s146 = sld [smem:[#allocation2]]
      %s147 = scalar_lea.smem [#allocation3], 0
      %148 = sst [smem:[%s147]] %s146
      %s149 = sld [smem:[#allocation2 + $0x1]]
      %s150 = scalar_lea.smem [#allocation3], 1
      %151 = sst [smem:[%s150]] %s149
    $region21: #{tpu_custom_call.1} parent=1 // pred_fallthru
      _
    // Predicated region
    $region22: #{tpu_custom_call.1} parent=1 // pred_check
      _
    $region23: #{tpu_custom_call.1} parent=1 // pred_check_branch
      %153 = sbr.rel (0) target = $region25
    $region24: #{tpu_custom_call.1} parent=1 // pred_region
      %s155 = ssub.s32 16, 16
      %156 = vsyncadd [#allocation4], %s155
      %159 = dma.smem_to_hbm [#allocation3], 16, %s3, [#allocation4]
    $region25: #{tpu_custom_call.1} parent=1 // pred_fallthru
      _
    // Predicated region
    $region26: #{tpu_custom_call.1} parent=1 // pred_check
      _
    $region27: #{tpu_custom_call.1} parent=1 // pred_check_branch
      %161 = sbr.rel (0) target = $region29
    $region28: #{tpu_custom_call.1} parent=1 // pred_region
      %162 = dma.done [#allocation4], 16
    $region29: #{tpu_custom_call.1} parent=1 // pred_fallthru
      _
    %163 = sfence
    %164 = vsyncpa [#allocation4], 1

</llo_original>
